<compile_context>
chip_gen: v7x
topology: tpu7x:2x2x1
jax: 0.10.0
libtpu: 0.0.40
codegen_flags: <defaults>
</compile_context>

<pallas_src>
import jax
import jax.numpy as jnp
import numpy as np
from jax import lax
from jax.experimental import pallas as pl
from jax.experimental.pallas import tpu as pltpu


# ----------------------------------------------------------------------------
# Pallas kernel: folded dilated 3x3 stencil over a (TB, H, W) block
# ----------------------------------------------------------------------------

def _ecc_kernel(k_ref, x_ref, o_ref):
    """k_ref: (9,) folded taps in SMEM (scalar prefetch); x_ref/o_ref: (TB, H, W)."""
    TB, H, W = x_ref.shape

    # Edge masks hoisted out of the per-image loop (built once per grid step).
    col = lax.broadcasted_iota(jnp.int32, (H, W), 1)
    row = lax.broadcasted_iota(jnp.int32, (H, W), 0)
    col_ok_l = col >= 2          # x[:, j-2] in-bounds
    col_ok_r = col < W - 2       # x[:, j+2] in-bounds
    row_ok_t = row >= 2          # t0[i-2]   in-bounds
    row_ok_b = row < H - 2       # t2[i+2]   in-bounds

    def one_image(i, carry):
        x = x_ref[i].astype(jnp.float32)                               # (H, W)
        # Column taps (dilation 2): roll(x, s)[j] == x[j - s].
        c_m = jnp.where(col_ok_l, pltpu.roll(x, 2, axis=1), 0.0)      # x[:, j-2]
        c_p = jnp.where(col_ok_r, pltpu.roll(x, W - 2, axis=1), 0.0)  # x[:, j+2]

        # Accumulator ordering keeps the live vreg set small.
        t0 = k_ref[0] * c_m + k_ref[1] * x + k_ref[2] * c_p
        acc = jnp.where(row_ok_t, pltpu.roll(t0, 2, axis=0), 0.0)      # t0[i-2]
        acc = acc + (k_ref[3] * c_m + k_ref[4] * x + k_ref[5] * c_p)   # t1[i]
        t2 = k_ref[6] * c_m + k_ref[7] * x + k_ref[8] * c_p
        acc = acc + jnp.where(row_ok_b, pltpu.roll(t2, H - 2, axis=0), 0.0)  # t2[i+2]

        o_ref[i] = acc.astype(o_ref.dtype)
        return carry

    lax.fori_loop(0, TB, one_image, 0, unroll=(TB <= 4))


# ----------------------------------------------------------------------------
# wrapper
# ----------------------------------------------------------------------------

def _round_up(v, m):
    return (v + m - 1) // m * m


def _choose_tb(B, per_image_bytes, target_bytes=4 << 20):
    """Largest divisor of B whose block stays <= ~4 MiB; keep >=2 grid steps
    (v7x megacore) once total work is non-trivial."""
    tb_cap = max(1, target_bytes // per_image_bytes)
    tb = max(d for d in range(1, B + 1) if B % d == 0 and d <= tb_cap)
    if B // tb < 2 and B >= 2 and B * per_image_bytes >= (2 << 20):
        tb = max(d for d in range(1, B // 2 + 1) if B % d == 0)
    return tb


def expan_compre_conv(x, dc_weight, dc2_weight):
    """Forward pass of Expan_Compre_Conv.

    x          : (B, H, W) float32
    dc_weight  : (2, 3, 3)  depthwise 3x3 taps (== DC.weight[:, 0])
    dc2_weight : (2,)       1x1 combine weights (== DC2.weight[0, :, 0, 0])
    """
    B, H, W = x.shape

    # Exact fold of DC2 into the depthwise taps (both DC input channels see the same data).
    keff = (dc2_weight[0] * dc_weight[0]
            + dc2_weight[1] * dc_weight[1]).reshape(9).astype(jnp.float32)

    # Lane/sublane-dense padding. Zero padding on the right/bottom reproduces the conv's
    # own zero padding for the +2 taps; padded output rows/cols are sliced off below.
    Hp, Wp = _round_up(H, 8), _round_up(W, 128)
    xp = x if (Hp == H and Wp == W) else jnp.pad(x, ((0, 0), (0, Hp - H), (0, Wp - W)))

    per_image_bytes = Hp * Wp * xp.dtype.itemsize
    # TODO(synk): a single image larger than scoped VMEM would need H-tiling with a
    # 2-row halo (overlapping index_map); not needed at these sizes.
    TB = _choose_tb(B, per_image_bytes)
    grid = (B // TB,)

    x_spec = pl.BlockSpec((TB, Hp, Wp), lambda b, keff_ref: (b, 0, 0))

    out = pl.pallas_call(
        _ecc_kernel,
        out_shape=jax.ShapeDtypeStruct((B, Hp, Wp), x.dtype),
        grid_spec=pltpu.PrefetchScalarGridSpec(
            num_scalar_prefetch=1,
            grid=grid,
            in_specs=[x_spec],
            out_specs=x_spec),
        compiler_params=pltpu.CompilerParams(
            dimension_semantics=("parallel",),
            vmem_limit_bytes=32 * 1024 * 1024),
        cost_estimate=pl.CostEstimate(
            flops=17 * B * Hp * Wp,
            transcendentals=0,
            bytes_accessed=2 * B * Hp * Wp * xp.dtype.itemsize),
    )(keff, xp)

    if Hp != H or Wp != W:
        out = out[:, :H, :W]
    return out


# ----------------------------------------------------------------------------
# pure-JAX reference (mirrors the PyTorch forward literally: 2 channels,
# depthwise dilated conv, then 1x1 combine)
# ----------------------------------------------------------------------------

def reference_forward(x, dc_weight, dc2_weight):
    B, H, W = x.shape
    xpad = jnp.pad(x, ((0, 0), (2, 2), (2, 2)))
    chans = []
    for c in range(2):
        acc = jnp.zeros_like(x)
        for u in range(3):
            for v in range(3):
                acc = acc + dc_weight[c, u, v] * xpad[:, 2 * u:2 * u + H, 2 * v:2 * v + W]
        chans.append(acc)
    return dc2_weight[0] * chans[0] + dc2_weight[1] * chans[1]


# ----------------------------------------------------------------------------

if __name__ == "__main__":
    B, H, W = 2, 64, 128                      # lane-dense last dim (128)
    key = jax.random.PRNGKey(0)
    kx, k1, k2 = jax.random.split(key, 3)
    x = jax.random.normal(kx, (B, H, W), jnp.float32)
    dc_w = 0.3 * jax.random.normal(k1, (2, 3, 3), jnp.float32)   # DC depthwise taps
    dc2_w = 0.5 * jax.random.normal(k2, (2,), jnp.float32)       # DC2 1x1 combine

    out = expan_compre_conv(x, dc_w, dc2_w)
    out = jax.block_until_ready(out)

    ref = reference_forward(x, dc_w, dc2_w)
    err = float(jnp.max(jnp.abs(out - ref)))
    assert out.shape == (B, H, W), out.shape
    assert np.isfinite(np.asarray(out)).all()
    assert err < 1e-3, f"kernel/reference mismatch: max abs err {err}"
    print("KERNEL_OK")
</pallas_src>

<mosaic_0001>
module attributes {stable_mosaic.version = 11 : i64} {
  func.func @_ecc_kernel(%arg0: i32, %arg1: memref<9xf32, #tpu.memory_space<smem>>, %arg2: memref<2x64x128xf32, #tpu.memory_space<vmem>>, %arg3: memref<2x64x128xf32, #tpu.memory_space<vmem>>) attributes {dimension_semantics = [#tpu.dimension_semantics<parallel>], iteration_bounds = array<i64: 1>, scalar_prefetch = 1 : i64, scratch_operands = 0 : i64, tpu.core_type = #tpu.core_type<tc>, window_params = [{transform_indices = @transform_0, window_bounds = array<i64: 2, 64, 128>}, {transform_indices = @transform_1, window_bounds = array<i64: 2, 64, 128>}]} {
    %0 = tpu.iota {dimensions = array<i32: 1>} : vector<64x128xi32>
    %1 = tpu.iota {dimensions = array<i32: 0>} : vector<64x128xi32>
    %c2_i32 = arith.constant 2 : i32
    %2 = vector.broadcast %c2_i32 : i32 to vector<64x128xi32>
    %3 = arith.cmpi sge, %0, %2 : vector<64x128xi32>
    %c126_i32 = arith.constant 126 : i32
    %4 = vector.broadcast %c126_i32 : i32 to vector<64x128xi32>
    %5 = arith.cmpi slt, %0, %4 : vector<64x128xi32>
    %c2_i32_0 = arith.constant 2 : i32
    %6 = vector.broadcast %c2_i32_0 : i32 to vector<64x128xi32>
    %7 = arith.cmpi sge, %1, %6 : vector<64x128xi32>
    %c62_i32 = arith.constant 62 : i32
    %8 = vector.broadcast %c62_i32 : i32 to vector<64x128xi32>
    %9 = arith.cmpi slt, %1, %8 : vector<64x128xi32>
    %c0_i32 = arith.constant 0 : i32
    %10 = arith.index_cast %c0_i32 : i32 to index
    %c0 = arith.constant 0 : index
    %c0_1 = arith.constant 0 : index
    %11 = vector.load %arg2[%10, %c0, %c0_1] : memref<2x64x128xf32, #tpu.memory_space<vmem>>, vector<1x64x128xf32>
    %12 = vector.shape_cast %11 : vector<1x64x128xf32> to vector<64x128xf32>
    %c2_i32_2 = arith.constant 2 : i32
    %13 = tpu.dynamic_rotate %12 by %c2_i32_2 dim 1 : vector<64x128xf32>, i32 -> vector<64x128xf32>
    %cst = arith.constant 0.000000e+00 : f32
    %14 = vector.broadcast %cst : f32 to vector<64x128xf32>
    %15 = arith.select %3, %13, %14 : vector<64x128xi1>, vector<64x128xf32>
    %c126_i32_3 = arith.constant 126 : i32
    %16 = tpu.dynamic_rotate %12 by %c126_i32_3 dim 1 : vector<64x128xf32>, i32 -> vector<64x128xf32>
    %cst_4 = arith.constant 0.000000e+00 : f32
    %17 = vector.broadcast %cst_4 : f32 to vector<64x128xf32>
    %18 = arith.select %5, %16, %17 : vector<64x128xi1>, vector<64x128xf32>
    %c0_5 = arith.constant 0 : index
    %19 = memref.load %arg1[%c0_5] : memref<9xf32, #tpu.memory_space<smem>>
    %20 = vector.broadcast %19 : f32 to vector<64x128xf32>
    %21 = arith.mulf %20, %15 : vector<64x128xf32>
    %c1 = arith.constant 1 : index
    %22 = memref.load %arg1[%c1] : memref<9xf32, #tpu.memory_space<smem>>
    %23 = vector.broadcast %22 : f32 to vector<64x128xf32>
    %24 = arith.mulf %23, %12 : vector<64x128xf32>
    %25 = arith.addf %21, %24 : vector<64x128xf32>
    %c2 = arith.constant 2 : index
    %26 = memref.load %arg1[%c2] : memref<9xf32, #tpu.memory_space<smem>>
    %27 = vector.broadcast %26 : f32 to vector<64x128xf32>
    %28 = arith.mulf %27, %18 : vector<64x128xf32>
    %29 = arith.addf %25, %28 : vector<64x128xf32>
    %c2_i32_6 = arith.constant 2 : i32
    %30 = tpu.dynamic_rotate %29 by %c2_i32_6 dim 0 : vector<64x128xf32>, i32 -> vector<64x128xf32>
    %cst_7 = arith.constant 0.000000e+00 : f32
    %31 = vector.broadcast %cst_7 : f32 to vector<64x128xf32>
    %32 = arith.select %7, %30, %31 : vector<64x128xi1>, vector<64x128xf32>
    %c3 = arith.constant 3 : index
    %33 = memref.load %arg1[%c3] : memref<9xf32, #tpu.memory_space<smem>>
    %34 = vector.broadcast %33 : f32 to vector<64x128xf32>
    %35 = arith.mulf %34, %15 : vector<64x128xf32>
    %c4 = arith.constant 4 : index
    %36 = memref.load %arg1[%c4] : memref<9xf32, #tpu.memory_space<smem>>
    %37 = vector.broadcast %36 : f32 to vector<64x128xf32>
    %38 = arith.mulf %37, %12 : vector<64x128xf32>
    %39 = arith.addf %35, %38 : vector<64x128xf32>
    %c5 = arith.constant 5 : index
    %40 = memref.load %arg1[%c5] : memref<9xf32, #tpu.memory_space<smem>>
    %41 = vector.broadcast %40 : f32 to vector<64x128xf32>
    %42 = arith.mulf %41, %18 : vector<64x128xf32>
    %43 = arith.addf %39, %42 : vector<64x128xf32>
    %44 = arith.addf %32, %43 : vector<64x128xf32>
    %c6 = arith.constant 6 : index
    %45 = memref.load %arg1[%c6] : memref<9xf32, #tpu.memory_space<smem>>
    %46 = vector.broadcast %45 : f32 to vector<64x128xf32>
    %47 = arith.mulf %46, %15 : vector<64x128xf32>
    %c7 = arith.constant 7 : index
    %48 = memref.load %arg1[%c7] : memref<9xf32, #tpu.memory_space<smem>>
    %49 = vector.broadcast %48 : f32 to vector<64x128xf32>
    %50 = arith.mulf %49, %12 : vector<64x128xf32>
    %51 = arith.addf %47, %50 : vector<64x128xf32>
    %c8 = arith.constant 8 : index
    %52 = memref.load %arg1[%c8] : memref<9xf32, #tpu.memory_space<smem>>
    %53 = vector.broadcast %52 : f32 to vector<64x128xf32>
    %54 = arith.mulf %53, %18 : vector<64x128xf32>
    %55 = arith.addf %51, %54 : vector<64x128xf32>
    %c62_i32_8 = arith.constant 62 : i32
    %56 = tpu.dynamic_rotate %55 by %c62_i32_8 dim 0 : vector<64x128xf32>, i32 -> vector<64x128xf32>
    %cst_9 = arith.constant 0.000000e+00 : f32
    %57 = vector.broadcast %cst_9 : f32 to vector<64x128xf32>
    %58 = arith.select %9, %56, %57 : vector<64x128xi1>, vector<64x128xf32>
    %59 = arith.addf %44, %58 : vector<64x128xf32>
    %60 = arith.index_cast %c0_i32 : i32 to index
    %c0_10 = arith.constant 0 : index
    %c0_11 = arith.constant 0 : index
    %61 = vector.load %arg3[%60, %c0_10, %c0_11] : memref<2x64x128xf32, #tpu.memory_space<vmem>>, vector<1x64x128xf32>
    %62 = vector.shape_cast %61 : vector<1x64x128xf32> to vector<64x128xf32>
    %63 = vector.shape_cast %59 : vector<64x128xf32> to vector<1x64x128xf32>
    tpu.vector_store %arg3[%60, %c0_10, %c0_11], %63 {strides = array<i32>} : memref<2x64x128xf32, #tpu.memory_space<vmem>>, vector<1x64x128xf32>,
    %c1_i32 = arith.constant 1 : i32
    %64 = arith.index_cast %c1_i32 : i32 to index
    %c0_12 = arith.constant 0 : index
    %c0_13 = arith.constant 0 : index
    %65 = vector.load %arg2[%64, %c0_12, %c0_13] : memref<2x64x128xf32, #tpu.memory_space<vmem>>, vector<1x64x128xf32>
    %66 = vector.shape_cast %65 : vector<1x64x128xf32> to vector<64x128xf32>
    %c2_i32_14 = arith.constant 2 : i32
    %67 = tpu.dynamic_rotate %66 by %c2_i32_14 dim 1 : vector<64x128xf32>, i32 -> vector<64x128xf32>
    %cst_15 = arith.constant 0.000000e+00 : f32
    %68 = vector.broadcast %cst_15 : f32 to vector<64x128xf32>
    %69 = arith.select %3, %67, %68 : vector<64x128xi1>, vector<64x128xf32>
    %c126_i32_16 = arith.constant 126 : i32
    %70 = tpu.dynamic_rotate %66 by %c126_i32_16 dim 1 : vector<64x128xf32>, i32 -> vector<64x128xf32>
    %cst_17 = arith.constant 0.000000e+00 : f32
    %71 = vector.broadcast %cst_17 : f32 to vector<64x128xf32>
    %72 = arith.select %5, %70, %71 : vector<64x128xi1>, vector<64x128xf32>
    %c0_18 = arith.constant 0 : index
    %73 = memref.load %arg1[%c0_18] : memref<9xf32, #tpu.memory_space<smem>>
    %74 = vector.broadcast %73 : f32 to vector<64x128xf32>
    %75 = arith.mulf %74, %69 : vector<64x128xf32>
    %c1_19 = arith.constant 1 : index
    %76 = memref.load %arg1[%c1_19] : memref<9xf32, #tpu.memory_space<smem>>
    %77 = vector.broadcast %76 : f32 to vector<64x128xf32>
    %78 = arith.mulf %77, %66 : vector<64x128xf32>
    %79 = arith.addf %75, %78 : vector<64x128xf32>
    %c2_20 = arith.constant 2 : index
    %80 = memref.load %arg1[%c2_20] : memref<9xf32, #tpu.memory_space<smem>>
    %81 = vector.broadcast %80 : f32 to vector<64x128xf32>
    %82 = arith.mulf %81, %72 : vector<64x128xf32>
    %83 = arith.addf %79, %82 : vector<64x128xf32>
    %c2_i32_21 = arith.constant 2 : i32
    %84 = tpu.dynamic_rotate %83 by %c2_i32_21 dim 0 : vector<64x128xf32>, i32 -> vector<64x128xf32>
    %cst_22 = arith.constant 0.000000e+00 : f32
    %85 = vector.broadcast %cst_22 : f32 to vector<64x128xf32>
    %86 = arith.select %7, %84, %85 : vector<64x128xi1>, vector<64x128xf32>
    %c3_23 = arith.constant 3 : index
    %87 = memref.load %arg1[%c3_23] : memref<9xf32, #tpu.memory_space<smem>>
    %88 = vector.broadcast %87 : f32 to vector<64x128xf32>
    %89 = arith.mulf %88, %69 : vector<64x128xf32>
    %c4_24 = arith.constant 4 : index
    %90 = memref.load %arg1[%c4_24] : memref<9xf32, #tpu.memory_space<smem>>
    %91 = vector.broadcast %90 : f32 to vector<64x128xf32>
    %92 = arith.mulf %91, %66 : vector<64x128xf32>
    %93 = arith.addf %89, %92 : vector<64x128xf32>
    %c5_25 = arith.constant 5 : index
    %94 = memref.load %arg1[%c5_25] : memref<9xf32, #tpu.memory_space<smem>>
    %95 = vector.broadcast %94 : f32 to vector<64x128xf32>
    %96 = arith.mulf %95, %72 : vector<64x128xf32>
    %97 = arith.addf %93, %96 : vector<64x128xf32>
    %98 = arith.addf %86, %97 : vector<64x128xf32>
    %c6_26 = arith.constant 6 : index
    %99 = memref.load %arg1[%c6_26] : memref<9xf32, #tpu.memory_space<smem>>
    %100 = vector.broadcast %99 : f32 to vector<64x128xf32>
    %101 = arith.mulf %100, %69 : vector<64x128xf32>
    %c7_27 = arith.constant 7 : index
    %102 = memref.load %arg1[%c7_27] : memref<9xf32, #tpu.memory_space<smem>>
    %103 = vector.broadcast %102 : f32 to vector<64x128xf32>
    %104 = arith.mulf %103, %66 : vector<64x128xf32>
    %105 = arith.addf %101, %104 : vector<64x128xf32>
    %c8_28 = arith.constant 8 : index
    %106 = memref.load %arg1[%c8_28] : memref<9xf32, #tpu.memory_space<smem>>
    %107 = vector.broadcast %106 : f32 to vector<64x128xf32>
    %108 = arith.mulf %107, %72 : vector<64x128xf32>
    %109 = arith.addf %105, %108 : vector<64x128xf32>
    %c62_i32_29 = arith.constant 62 : i32
    %110 = tpu.dynamic_rotate %109 by %c62_i32_29 dim 0 : vector<64x128xf32>, i32 -> vector<64x128xf32>
    %cst_30 = arith.constant 0.000000e+00 : f32
    %111 = vector.broadcast %cst_30 : f32 to vector<64x128xf32>
    %112 = arith.select %9, %110, %111 : vector<64x128xi1>, vector<64x128xf32>
    %113 = arith.addf %98, %112 : vector<64x128xf32>
    %114 = arith.index_cast %c1_i32 : i32 to index
    %c0_31 = arith.constant 0 : index
    %c0_32 = arith.constant 0 : index
    %115 = vector.load %arg3[%114, %c0_31, %c0_32] : memref<2x64x128xf32, #tpu.memory_space<vmem>>, vector<1x64x128xf32>
    %116 = vector.shape_cast %115 : vector<1x64x128xf32> to vector<64x128xf32>
    %117 = vector.shape_cast %113 : vector<64x128xf32> to vector<1x64x128xf32>
    tpu.vector_store %arg3[%114, %c0_31, %c0_32], %117 {strides = array<i32>} : memref<2x64x128xf32, #tpu.memory_space<vmem>>, vector<1x64x128xf32>,
    %c2_i32_33 = arith.constant 2 : i32
    return
  }
  func.func @transform_0(%arg0: i32, %arg1: memref<9xf32, #tpu.memory_space<smem>>) -> (i32, i32, i32) {
    %c0_i32 = arith.constant 0 : i32
    %c0_i32_0 = arith.constant 0 : i32
    %c0_i32_1 = arith.constant 0 : i32
    return %arg0, %c0_i32, %c0_i32_0 : i32, i32, i32
  }
  func.func @transform_1(%arg0: i32, %arg1: memref<9xf32, #tpu.memory_space<smem>>) -> (i32, i32, i32) {
    %c0_i32 = arith.constant 0 : i32
    %c0_i32_0 = arith.constant 0 : i32
    %c0_i32_1 = arith.constant 0 : i32
    return %arg0, %c0_i32, %c0_i32_0 : i32, i32, i32
  }
}

</mosaic_0001>

<llo_original>
// kernel: tpu_custom_call.1
$region0: #{tpu_custom_call.1}
  #allocation0 [shape = 'u32[]', space=smem, size = 0x4, offset = 0x4, fixed_abs, tag = 'smem constant byte address 0x4 - core index']
  #allocation1 [shape = 'u32[144,128]{1,0:T(1,128)}', space=vmem, size = 0x12000, scoped, tag = 'internal scratch']
  #allocation2 [shape = 's32[1]{0}', space=sflag, size = 0x4, scoped, tag = 'scoped memory for tpu_custom_call.1']
  #allocation3 [shape = 'u8[512]{0}', space=smem, size = 0x200, scoped, tag = 'prefetched SMEM operand 0']
  %s0 = inlined_call_operand.hbm [shape: f32[9], index: 0, kind: input, shape index: {}]
  %s1 = inlined_call_operand.hbm [shape: f32[2,64,128], index: 1, kind: input, shape index: {}]
  %s2 = inlined_call_operand.hbm [shape: f32[2,64,128], index: 2, kind: output, shape index: {}]
  %s3 = sld [smem:[#allocation0]]
  $region18: #{tpu_custom_call.1} parent=0
    _
  %s5 = ssub.s32 1, %s3
  %s6 = scalar_select 0, %s5, %s3
  %8 = dma.hbm_to_smem %s0, 16, [#allocation3], [#allocation2]
  %9 = dma.done [#allocation2], 16
  %10 = sfence
  $region1: #{tpu_custom_call.1} parent=0
    #allocation4 [shape = 'u8[65536]{0}', space=vmem, size = 0x10000, scoped, tag = 'input window, operand 1, single buffered']
    #allocation5 [shape = 's32[1]{0}', space=sflag, size = 0x4, scoped, tag = 'scoped memory for tpu_custom_call.1']
    #allocation6 [shape = 's32[1]{0}', space=sflag, size = 0x4, scoped, tag = 'scoped memory for tpu_custom_call.1']
    #allocation7 [shape = 'u8[65536]{0}', space=vmem, size = 0x10000, scoped, tag = 'output window, operand 0, single buffered']
    %11 = vsyncpa [#allocation5], 0
    %12 = vsyncpa [#allocation6], 0
    // Predicated region
    $region2: #{tpu_custom_call.1} parent=1 // pred_check
      _
    $region3: #{tpu_custom_call.1} parent=1 // pred_check_branch
      %14 = sbr.rel (0) target = $region5
    $region4: #{tpu_custom_call.1} parent=1 // pred_region
      %s16 = ssub.s32 2048, 2048
      %17 = vsyncadd [#allocation5], %s16
      %s18 = sshll.u32 [#allocation4], 4
      %s19 = int_to_ptr.vmem [resolvable:$true] %s18
      %24 = dma.hbm_to_vmem [thread:$0]  %s1, 2048, %s19, [#allocation5], 128, 128, 8
    $region5: #{tpu_custom_call.1} parent=1 // pred_fallthru
      _
    // Predicated region
    $region6: #{tpu_custom_call.1} parent=1 // pred_check
      _
    $region7: #{tpu_custom_call.1} parent=1 // pred_check_branch
      %26 = sbr.rel (0) target = $region9
    $region8: #{tpu_custom_call.1} parent=1 // pred_region
      %27 = dma.done [#allocation5], 2048
    $region9: #{tpu_custom_call.1} parent=1 // pred_fallthru
      _
    %v28 = vlaneseq
    %v29 = vand.u32 %v28, 127
    %v30 = vlaneseq
    %v31 = vshrl.u32 %v30, 7
    %v32 = vadd.s32 %v31, 8
    %v33 = vadd.s32 %v31, 16
    %v34 = vadd.s32 %v31, 24
    %v35 = vadd.s32 %v31, 32
    %v36 = vadd.s32 %v31, 40
    %v37 = vadd.s32 %v31, 48
    %v38 = vadd.s32 %v31, 56
    %vm39 = vcmp.ge.s32.totalorder %v29, 2
    %vm40 = vcmp.lt.s32.totalorder %v29, 126
    %vm41 = vcmp.ge.s32.totalorder %v31, 2
    %vm42 = vcmp.ge.s32.totalorder %v32, 2
    %vm43 = vcmp.ge.s32.totalorder %v33, 2
    %vm44 = vcmp.ge.s32.totalorder %v34, 2
    %vm45 = vcmp.ge.s32.totalorder %v35, 2
    %vm46 = vcmp.ge.s32.totalorder %v36, 2
    %vm47 = vcmp.ge.s32.totalorder %v37, 2
    %vm48 = vcmp.ge.s32.totalorder %v38, 2
    %vm49 = vcmp.lt.s32.totalorder %v31, 62
    %vm50 = vcmp.lt.s32.totalorder %v32, 62
    %vm51 = vcmp.lt.s32.totalorder %v33, 62
    %vm52 = vcmp.lt.s32.totalorder %v34, 62
    %vm53 = vcmp.lt.s32.totalorder %v35, 62
    %vm54 = vcmp.lt.s32.totalorder %v36, 62
    %vm55 = vcmp.lt.s32.totalorder %v37, 62
    %vm56 = vcmp.lt.s32.totalorder %v38, 62
    %v57 = vld [vmem:[#allocation4] sm:$0xff]
    %v58 = vld [vmem:[#allocation4 + $0x8] sm:$0xff]
    %v59 = vld [vmem:[#allocation4 + $0x10] sm:$0xff]
    %v60 = vld [vmem:[#allocation4 + $0x18] sm:$0xff]
    %v61 = vld [vmem:[#allocation4 + $0x20] sm:$0xff]
    %v62 = vld [vmem:[#allocation4 + $0x28] sm:$0xff]
    %v63 = vld [vmem:[#allocation4 + $0x30] sm:$0xff]
    %v64 = vld [vmem:[#allocation4 + $0x38] sm:$0xff]
    %65 = vrot.lane.b32.xlu0 %v57, 2
    %v66 = vpop.permute.xlu0 %65
    %67 = vrot.lane.b32.xlu0 %v58, 2
    %v68 = vpop.permute.xlu0 %67
    %69 = vrot.lane.b32.xlu0 %v59, 2
    %v70 = vpop.permute.xlu0 %69
    %71 = vrot.lane.b32.xlu0 %v60, 2
    %v72 = vpop.permute.xlu0 %71
    %73 = vrot.lane.b32.xlu0 %v61, 2
    %v74 = vpop.permute.xlu0 %73
    %75 = vrot.lane.b32.xlu0 %v62, 2
    %v76 = vpop.permute.xlu0 %75
    %77 = vrot.lane.b32.xlu0 %v63, 2
    %v78 = vpop.permute.xlu0 %77
    %79 = vrot.lane.b32.xlu0 %v64, 2
    %v80 = vpop.permute.xlu0 %79
    %v81 = vsel %vm39, %v66, 0.0
    %v82 = vsel %vm39, %v68, 0.0
    %v83 = vsel %vm39, %v70, 0.0
    %v84 = vsel %vm39, %v72, 0.0
    %v85 = vsel %vm39, %v74, 0.0
    %v86 = vsel %vm39, %v76, 0.0
    %v87 = vsel %vm39, %v78, 0.0
    %v88 = vsel %vm39, %v80, 0.0
    %89 = vrot.lane.b32.xlu0 %v57, 126
    %v90 = vpop.permute.xlu0 %89
    %91 = vrot.lane.b32.xlu0 %v58, 126
    %v92 = vpop.permute.xlu0 %91
    %93 = vrot.lane.b32.xlu0 %v59, 126
    %v94 = vpop.permute.xlu0 %93
    %95 = vrot.lane.b32.xlu0 %v60, 126
    %v96 = vpop.permute.xlu0 %95
    %97 = vrot.lane.b32.xlu0 %v61, 126
    %v98 = vpop.permute.xlu0 %97
    %99 = vrot.lane.b32.xlu0 %v62, 126
    %v100 = vpop.permute.xlu0 %99
    %101 = vrot.lane.b32.xlu0 %v63, 126
    %v102 = vpop.permute.xlu0 %101
    %103 = vrot.lane.b32.xlu0 %v64, 126
    %v104 = vpop.permute.xlu0 %103
    %v105 = vsel %vm40, %v90, 0.0
    %v106 = vsel %vm40, %v92, 0.0
    %v107 = vsel %vm40, %v94, 0.0
    %v108 = vsel %vm40, %v96, 0.0
    %v109 = vsel %vm40, %v98, 0.0
    %v110 = vsel %vm40, %v100, 0.0
    %v111 = vsel %vm40, %v102, 0.0
    %v112 = vsel %vm40, %v104, 0.0
    %s113 = sld [smem:[#allocation3]]
    %v114 = vstv %s113
    %v115 = vmul.f32 %v114, %v81
    %v116 = vmul.f32 %v114, %v82
    %v117 = vmul.f32 %v114, %v83
    %v118 = vmul.f32 %v114, %v84
    %v119 = vmul.f32 %v114, %v85
    %v120 = vmul.f32 %v114, %v86
    %v121 = vmul.f32 %v114, %v87
    %v122 = vmul.f32 %v114, %v88
    %s123 = sld [smem:[#allocation3 + $0x1]]
    %v124 = vstv %s123
    %v125 = vmul.f32 %v124, %v57
    %v126 = vmul.f32 %v124, %v58
    %v127 = vmul.f32 %v124, %v59
    %v128 = vmul.f32 %v124, %v60
    %v129 = vmul.f32 %v124, %v61
    %v130 = vmul.f32 %v124, %v62
    %v131 = vmul.f32 %v124, %v63
    %v132 = vmul.f32 %v124, %v64
    %v133 = vadd.f32 %v115, %v125
    %v134 = vadd.f32 %v116, %v126
    %v135 = vadd.f32 %v117, %v127
    %v136 = vadd.f32 %v118, %v128
    %v137 = vadd.f32 %v119, %v129
    %v138 = vadd.f32 %v120, %v130
    %v139 = vadd.f32 %v121, %v131
    %v140 = vadd.f32 %v122, %v132
    %s141 = sld [smem:[#allocation3 + $0x2]]
    %v142 = vstv %s141
    %v143 = vmul.f32 %v142, %v105
    %v144 = vmul.f32 %v142, %v106
    %v145 = vmul.f32 %v142, %v107
    %v146 = vmul.f32 %v142, %v108
    %v147 = vmul.f32 %v142, %v109
    %v148 = vmul.f32 %v142, %v110
    %v149 = vmul.f32 %v142, %v111
    %v150 = vmul.f32 %v142, %v112
    %v151 = vadd.f32 %v133, %v143
    %v152 = vadd.f32 %v134, %v144
    %v153 = vadd.f32 %v135, %v145
    %v154 = vadd.f32 %v136, %v146
    %v155 = vadd.f32 %v137, %v147
    %v156 = vadd.f32 %v138, %v148
    %v157 = vadd.f32 %v139, %v149
    %v158 = vadd.f32 %v140, %v150
    %v159 = vrot.slane %v151, 6
    %v160 = vrot.slane %v152, 6
    %v161 = vrot.slane %v153, 6
    %v162 = vrot.slane %v154, 6
    %v163 = vrot.slane %v155, 6
    %v164 = vrot.slane %v156, 6
    %v165 = vrot.slane %v157, 6
    %v166 = vrot.slane %v158, 6
    %vm167 = vcmp.lt.s32.totalorder %v31, 2
    %v168 = vsel %vm167, %v165, %v166
    %v169 = vsel %vm167, %v164, %v165
    %v170 = vsel %vm167, %v163, %v164
    %v171 = vsel %vm167, %v162, %v163
    %v172 = vsel %vm167, %v161, %v162
    %v173 = vsel %vm167, %v160, %v161
    %v174 = vsel %vm167, %v159, %v160
    %v175 = vsel %vm167, %v166, %v159
    %v176 = vsel %vm41, %v175, 0.0
    %v177 = vsel %vm42, %v174, 0.0
    %v178 = vsel %vm43, %v173, 0.0
    %v179 = vsel %vm44, %v172, 0.0
    %v180 = vsel %vm45, %v171, 0.0
    %v181 = vsel %vm46, %v170, 0.0
    %v182 = vsel %vm47, %v169, 0.0
    %v183 = vsel %vm48, %v168, 0.0
    %s184 = sld [smem:[#allocation3 + $0x3]]
    %v185 = vstv %s184
    %v186 = vmul.f32 %v185, %v81
    %v187 = vmul.f32 %v185, %v82
    %v188 = vmul.f32 %v185, %v83
    %v189 = vmul.f32 %v185, %v84
    %v190 = vmul.f32 %v185, %v85
    %v191 = vmul.f32 %v185, %v86
    %v192 = vmul.f32 %v185, %v87
    %v193 = vmul.f32 %v185, %v88
    %s194 = sld [smem:[#allocation3 + $0x4]]
    %v195 = vstv %s194
    %v196 = vmul.f32 %v195, %v57
    %v197 = vmul.f32 %v195, %v58
    %v198 = vmul.f32 %v195, %v59
    %v199 = vmul.f32 %v195, %v60
    %v200 = vmul.f32 %v195, %v61
    %v201 = vmul.f32 %v195, %v62
    %v202 = vmul.f32 %v195, %v63
    %v203 = vmul.f32 %v195, %v64
    %v204 = vadd.f32 %v186, %v196
    %v205 = vadd.f32 %v187, %v197
    %v206 = vadd.f32 %v188, %v198
    %v207 = vadd.f32 %v189, %v199
    %v208 = vadd.f32 %v190, %v200
    %v209 = vadd.f32 %v191, %v201
    %v210 = vadd.f32 %v192, %v202
    %v211 = vadd.f32 %v193, %v203
    %s212 = sld [smem:[#allocation3 + $0x5]]
    %v213 = vstv %s212
    %v214 = vmul.f32 %v213, %v105
    %v215 = vmul.f32 %v213, %v106
    %v216 = vmul.f32 %v213, %v107
    %v217 = vmul.f32 %v213, %v108
    %v218 = vmul.f32 %v213, %v109
    %v219 = vmul.f32 %v213, %v110
    %v220 = vmul.f32 %v213, %v111
    %v221 = vmul.f32 %v213, %v112
    %v222 = vadd.f32 %v204, %v214
    %v223 = vadd.f32 %v205, %v215
    %v224 = vadd.f32 %v206, %v216
    %v225 = vadd.f32 %v207, %v217
    %v226 = vadd.f32 %v208, %v218
    %v227 = vadd.f32 %v209, %v219
    %v228 = vadd.f32 %v210, %v220
    %v229 = vadd.f32 %v211, %v221
    %v230 = vadd.f32 %v176, %v222
    %v231 = vadd.f32 %v177, %v223
    %v232 = vadd.f32 %v178, %v224
    %v233 = vadd.f32 %v179, %v225
    %v234 = vadd.f32 %v180, %v226
    %v235 = vadd.f32 %v181, %v227
    %v236 = vadd.f32 %v182, %v228
    %v237 = vadd.f32 %v183, %v229
    %s238 = sld [smem:[#allocation3 + $0x6]]
    %v239 = vstv %s238
    %v240 = vmul.f32 %v239, %v81
    %v241 = vmul.f32 %v239, %v82
    %v242 = vmul.f32 %v239, %v83
    %v243 = vmul.f32 %v239, %v84
    %v244 = vmul.f32 %v239, %v85
    %v245 = vmul.f32 %v239, %v86
    %v246 = vmul.f32 %v239, %v87
    %v247 = vmul.f32 %v239, %v88
    %s248 = sld [smem:[#allocation3 + $0x7]]
    %v249 = vstv %s248
    %v250 = vmul.f32 %v249, %v57
    %v251 = vmul.f32 %v249, %v58
    %v252 = vmul.f32 %v249, %v59
    %v253 = vmul.f32 %v249, %v60
    %v254 = vmul.f32 %v249, %v61
    %v255 = vmul.f32 %v249, %v62
    %v256 = vmul.f32 %v249, %v63
    %v257 = vmul.f32 %v249, %v64
    %v258 = vadd.f32 %v240, %v250
    %v259 = vadd.f32 %v241, %v251
    %v260 = vadd.f32 %v242, %v252
    %v261 = vadd.f32 %v243, %v253
    %v262 = vadd.f32 %v244, %v254
    %v263 = vadd.f32 %v245, %v255
    %v264 = vadd.f32 %v246, %v256
    %v265 = vadd.f32 %v247, %v257
    %s266 = sld [smem:[#allocation3 + $0x8]]
    %v267 = vstv %s266
    %v268 = vmul.f32 %v267, %v105
    %v269 = vmul.f32 %v267, %v106
    %v270 = vmul.f32 %v267, %v107
    %v271 = vmul.f32 %v267, %v108
    %v272 = vmul.f32 %v267, %v109
    %v273 = vmul.f32 %v267, %v110
    %v274 = vmul.f32 %v267, %v111
    %v275 = vmul.f32 %v267, %v112
    %v276 = vadd.f32 %v258, %v268
    %v277 = vadd.f32 %v259, %v269
    %v278 = vadd.f32 %v260, %v270
    %v279 = vadd.f32 %v261, %v271
    %v280 = vadd.f32 %v262, %v272
    %v281 = vadd.f32 %v263, %v273
    %v282 = vadd.f32 %v264, %v274
    %v283 = vadd.f32 %v265, %v275
    %v284 = vrot.slane %v276, 2
    %v285 = vrot.slane %v277, 2
    %v286 = vrot.slane %v278, 2
    %v287 = vrot.slane %v279, 2
    %v288 = vrot.slane %v280, 2
    %v289 = vrot.slane %v281, 2
    %v290 = vrot.slane %v282, 2
    %v291 = vrot.slane %v283, 2
    %vm292 = vcmp.lt.s32.totalorder %v31, 6
    %v293 = vsel %vm292, %v290, %v291
    %v294 = vsel %vm292, %v289, %v290
    %v295 = vsel %vm292, %v288, %v289
    %v296 = vsel %vm292, %v287, %v288
    %v297 = vsel %vm292, %v286, %v287
    %v298 = vsel %vm292, %v285, %v286
    %v299 = vsel %vm292, %v284, %v285
    %v300 = vsel %vm292, %v291, %v284
    %v301 = vsel %vm49, %v299, 0.0
    %v302 = vsel %vm50, %v298, 0.0
    %v303 = vsel %vm51, %v297, 0.0
    %v304 = vsel %vm52, %v296, 0.0
    %v305 = vsel %vm53, %v295, 0.0
    %v306 = vsel %vm54, %v294, 0.0
    %v307 = vsel %vm55, %v293, 0.0
    %v308 = vsel %vm56, %v300, 0.0
    %v309 = vadd.f32 %v230, %v301
    %v310 = vadd.f32 %v231, %v302
    %v311 = vadd.f32 %v232, %v303
    %v312 = vadd.f32 %v233, %v304
    %v313 = vadd.f32 %v234, %v305
    %v314 = vadd.f32 %v235, %v306
    %v315 = vadd.f32 %v236, %v307
    %v316 = vadd.f32 %v237, %v308
    %317 = vst [vmem:[#allocation7] sm:$0xff] %v309
    %318 = vst [vmem:[#allocation7 + $0x8] sm:$0xff] %v310
    %319 = vst [vmem:[#allocation7 + $0x10] sm:$0xff] %v311
    %320 = vst [vmem:[#allocation7 + $0x18] sm:$0xff] %v312
    %321 = vst [vmem:[#allocation7 + $0x20] sm:$0xff] %v313
    %322 = vst [vmem:[#allocation7 + $0x28] sm:$0xff] %v314
    %323 = vst [vmem:[#allocation7 + $0x30] sm:$0xff] %v315
    %324 = vst [vmem:[#allocation7 + $0x38] sm:$0xff] %v316
    %s325 = scalar_lea.vmem [#allocation4], 64
    %v326 = vld [vmem:[%s325] sm:$0xff]
    %v327 = vld [vmem:[%s325 + $0x8] sm:$0xff]
    %v328 = vld [vmem:[%s325 + $0x10] sm:$0xff]
    %v329 = vld [vmem:[%s325 + $0x18] sm:$0xff]
    %v330 = vld [vmem:[%s325 + $0x20] sm:$0xff]
    %v331 = vld [vmem:[%s325 + $0x28] sm:$0xff]
    %v332 = vld [vmem:[%s325 + $0x30] sm:$0xff]
    %v333 = vld [vmem:[%s325 + $0x38] sm:$0xff]
    %334 = vrot.lane.b32.xlu0 %v326, 2
    %v335 = vpop.permute.xlu0 %334
    %336 = vrot.lane.b32.xlu0 %v327, 2
    %v337 = vpop.permute.xlu0 %336
    %338 = vrot.lane.b32.xlu0 %v328, 2
    %v339 = vpop.permute.xlu0 %338
    %340 = vrot.lane.b32.xlu0 %v329, 2
    %v341 = vpop.permute.xlu0 %340
    %342 = vrot.lane.b32.xlu0 %v330, 2
    %v343 = vpop.permute.xlu0 %342
    %344 = vrot.lane.b32.xlu0 %v331, 2
    %v345 = vpop.permute.xlu0 %344
    %346 = vrot.lane.b32.xlu0 %v332, 2
    %v347 = vpop.permute.xlu0 %346
    %348 = vrot.lane.b32.xlu0 %v333, 2
    %v349 = vpop.permute.xlu0 %348
    %v350 = vsel %vm39, %v335, 0.0
    %v351 = vsel %vm39, %v337, 0.0
    %v352 = vsel %vm39, %v339, 0.0
    %v353 = vsel %vm39, %v341, 0.0
    %v354 = vsel %vm39, %v343, 0.0
    %v355 = vsel %vm39, %v345, 0.0
    %v356 = vsel %vm39, %v347, 0.0
    %v357 = vsel %vm39, %v349, 0.0
    %358 = vrot.lane.b32.xlu0 %v326, 126
    %v359 = vpop.permute.xlu0 %358
    %360 = vrot.lane.b32.xlu0 %v327, 126
    %v361 = vpop.permute.xlu0 %360
    %362 = vrot.lane.b32.xlu0 %v328, 126
    %v363 = vpop.permute.xlu0 %362
    %364 = vrot.lane.b32.xlu0 %v329, 126
    %v365 = vpop.permute.xlu0 %364
    %366 = vrot.lane.b32.xlu0 %v330, 126
    %v367 = vpop.permute.xlu0 %366
    %368 = vrot.lane.b32.xlu0 %v331, 126
    %v369 = vpop.permute.xlu0 %368
    %370 = vrot.lane.b32.xlu0 %v332, 126
    %v371 = vpop.permute.xlu0 %370
    %372 = vrot.lane.b32.xlu0 %v333, 126
    %v373 = vpop.permute.xlu0 %372
    %v374 = vsel %vm40, %v359, 0.0
    %v375 = vsel %vm40, %v361, 0.0
    %v376 = vsel %vm40, %v363, 0.0
    %v377 = vsel %vm40, %v365, 0.0
    %v378 = vsel %vm40, %v367, 0.0
    %v379 = vsel %vm40, %v369, 0.0
    %v380 = vsel %vm40, %v371, 0.0
    %v381 = vsel %vm40, %v373, 0.0
    %s382 = sld [smem:[#allocation3]]
    %v383 = vstv %s382
    %v384 = vmul.f32 %v383, %v350
    %v385 = vmul.f32 %v383, %v351
    %v386 = vmul.f32 %v383, %v352
    %v387 = vmul.f32 %v383, %v353
    %v388 = vmul.f32 %v383, %v354
    %v389 = vmul.f32 %v383, %v355
    %v390 = vmul.f32 %v383, %v356
    %v391 = vmul.f32 %v383, %v357
    %s392 = sld [smem:[#allocation3 + $0x1]]
    %v393 = vstv %s392
    %v394 = vmul.f32 %v393, %v326
    %v395 = vmul.f32 %v393, %v327
    %v396 = vmul.f32 %v393, %v328
    %v397 = vmul.f32 %v393, %v329
    %v398 = vmul.f32 %v393, %v330
    %v399 = vmul.f32 %v393, %v331
    %v400 = vmul.f32 %v393, %v332
    %v401 = vmul.f32 %v393, %v333
    %v402 = vadd.f32 %v384, %v394
    %v403 = vadd.f32 %v385, %v395
    %v404 = vadd.f32 %v386, %v396
    %v405 = vadd.f32 %v387, %v397
    %v406 = vadd.f32 %v388, %v398
    %v407 = vadd.f32 %v389, %v399
    %v408 = vadd.f32 %v390, %v400
    %v409 = vadd.f32 %v391, %v401
    %s410 = sld [smem:[#allocation3 + $0x2]]
    %v411 = vstv %s410
    %v412 = vmul.f32 %v411, %v374
    %v413 = vmul.f32 %v411, %v375
    %v414 = vmul.f32 %v411, %v376
    %v415 = vmul.f32 %v411, %v377
    %v416 = vmul.f32 %v411, %v378
    %v417 = vmul.f32 %v411, %v379
    %v418 = vmul.f32 %v411, %v380
    %v419 = vmul.f32 %v411, %v381
    %v420 = vadd.f32 %v402, %v412
    %v421 = vadd.f32 %v403, %v413
    %v422 = vadd.f32 %v404, %v414
    %v423 = vadd.f32 %v405, %v415
    %v424 = vadd.f32 %v406, %v416
    %v425 = vadd.f32 %v407, %v417
    %v426 = vadd.f32 %v408, %v418
    %v427 = vadd.f32 %v409, %v419
    %v428 = vrot.slane %v420, 6
    %v429 = vrot.slane %v421, 6
    %v430 = vrot.slane %v422, 6
    %v431 = vrot.slane %v423, 6
    %v432 = vrot.slane %v424, 6
    %v433 = vrot.slane %v425, 6
    %v434 = vrot.slane %v426, 6
    %v435 = vrot.slane %v427, 6
    %v436 = vsel %vm167, %v434, %v435
    %v437 = vsel %vm167, %v433, %v434
    %v438 = vsel %vm167, %v432, %v433
    %v439 = vsel %vm167, %v431, %v432
    %v440 = vsel %vm167, %v430, %v431
    %v441 = vsel %vm167, %v429, %v430
    %v442 = vsel %vm167, %v428, %v429
    %v443 = vsel %vm167, %v435, %v428
    %v444 = vsel %vm41, %v443, 0.0
    %v445 = vsel %vm42, %v442, 0.0
    %v446 = vsel %vm43, %v441, 0.0
    %v447 = vsel %vm44, %v440, 0.0
    %v448 = vsel %vm45, %v439, 0.0
    %v449 = vsel %vm46, %v438, 0.0
    %v450 = vsel %vm47, %v437, 0.0
    %v451 = vsel %vm48, %v436, 0.0
    %s452 = sld [smem:[#allocation3 + $0x3]]
    %v453 = vstv %s452
    %v454 = vmul.f32 %v453, %v350
    %v455 = vmul.f32 %v453, %v351
    %v456 = vmul.f32 %v453, %v352
    %v457 = vmul.f32 %v453, %v353
    %v458 = vmul.f32 %v453, %v354
    %v459 = vmul.f32 %v453, %v355
    %v460 = vmul.f32 %v453, %v356
    %v461 = vmul.f32 %v453, %v357
    %s462 = sld [smem:[#allocation3 + $0x4]]
    %v463 = vstv %s462
    %v464 = vmul.f32 %v463, %v326
    %v465 = vmul.f32 %v463, %v327
    %v466 = vmul.f32 %v463, %v328
    %v467 = vmul.f32 %v463, %v329
    %v468 = vmul.f32 %v463, %v330
    %v469 = vmul.f32 %v463, %v331
    %v470 = vmul.f32 %v463, %v332
    %v471 = vmul.f32 %v463, %v333
    %v472 = vadd.f32 %v454, %v464
    %v473 = vadd.f32 %v455, %v465
    %v474 = vadd.f32 %v456, %v466
    %v475 = vadd.f32 %v457, %v467
    %v476 = vadd.f32 %v458, %v468
    %v477 = vadd.f32 %v459, %v469
    %v478 = vadd.f32 %v460, %v470
    %v479 = vadd.f32 %v461, %v471
    %s480 = sld [smem:[#allocation3 + $0x5]]
    %v481 = vstv %s480
    %v482 = vmul.f32 %v481, %v374
    %v483 = vmul.f32 %v481, %v375
    %v484 = vmul.f32 %v481, %v376
    %v485 = vmul.f32 %v481, %v377
    %v486 = vmul.f32 %v481, %v378
    %v487 = vmul.f32 %v481, %v379
    %v488 = vmul.f32 %v481, %v380
    %v489 = vmul.f32 %v481, %v381
    %v490 = vadd.f32 %v472, %v482
    %v491 = vadd.f32 %v473, %v483
    %v492 = vadd.f32 %v474, %v484
    %v493 = vadd.f32 %v475, %v485
    %v494 = vadd.f32 %v476, %v486
    %v495 = vadd.f32 %v477, %v487
    %v496 = vadd.f32 %v478, %v488
    %v497 = vadd.f32 %v479, %v489
    %v498 = vadd.f32 %v444, %v490
    %v499 = vadd.f32 %v445, %v491
    %v500 = vadd.f32 %v446, %v492
    %v501 = vadd.f32 %v447, %v493
    %v502 = vadd.f32 %v448, %v494
    %v503 = vadd.f32 %v449, %v495
    %v504 = vadd.f32 %v450, %v496
    %v505 = vadd.f32 %v451, %v497
    %s506 = sld [smem:[#allocation3 + $0x6]]
    %v507 = vstv %s506
    %v508 = vmul.f32 %v507, %v350
    %v509 = vmul.f32 %v507, %v351
    %v510 = vmul.f32 %v507, %v352
    %v511 = vmul.f32 %v507, %v353
    %v512 = vmul.f32 %v507, %v354
    %v513 = vmul.f32 %v507, %v355
    %v514 = vmul.f32 %v507, %v356
    %v515 = vmul.f32 %v507, %v357
    %s516 = sld [smem:[#allocation3 + $0x7]]
    %v517 = vstv %s516
    %v518 = vmul.f32 %v517, %v326
    %v519 = vmul.f32 %v517, %v327
    %v520 = vmul.f32 %v517, %v328
    %v521 = vmul.f32 %v517, %v329
    %v522 = vmul.f32 %v517, %v330
    %v523 = vmul.f32 %v517, %v331
    %v524 = vmul.f32 %v517, %v332
    %v525 = vmul.f32 %v517, %v333
    %v526 = vadd.f32 %v508, %v518
    %v527 = vadd.f32 %v509, %v519
    %v528 = vadd.f32 %v510, %v520
    %v529 = vadd.f32 %v511, %v521
    %v530 = vadd.f32 %v512, %v522
    %v531 = vadd.f32 %v513, %v523
    %v532 = vadd.f32 %v514, %v524
    %v533 = vadd.f32 %v515, %v525
    %s534 = sld [smem:[#allocation3 + $0x8]]
    %v535 = vstv %s534
    %v536 = vmul.f32 %v535, %v374
    %v537 = vmul.f32 %v535, %v375
    %v538 = vmul.f32 %v535, %v376
    %v539 = vmul.f32 %v535, %v377
    %v540 = vmul.f32 %v535, %v378
    %v541 = vmul.f32 %v535, %v379
    %v542 = vmul.f32 %v535, %v380
    %v543 = vmul.f32 %v535, %v381
    %v544 = vadd.f32 %v526, %v536
    %v545 = vadd.f32 %v527, %v537
    %v546 = vadd.f32 %v528, %v538
    %v547 = vadd.f32 %v529, %v539
    %v548 = vadd.f32 %v530, %v540
    %v549 = vadd.f32 %v531, %v541
    %v550 = vadd.f32 %v532, %v542
    %v551 = vadd.f32 %v533, %v543
    %v552 = vrot.slane %v544, 2
    %v553 = vrot.slane %v545, 2
    %v554 = vrot.slane %v546, 2
    %v555 = vrot.slane %v547, 2
    %v556 = vrot.slane %v548, 2
    %v557 = vrot.slane %v549, 2
    %v558 = vrot.slane %v550, 2
    %v559 = vrot.slane %v551, 2
    %v560 = vsel %vm292, %v558, %v559
    %v561 = vsel %vm292, %v557, %v558
    %v562 = vsel %vm292, %v556, %v557
    %v563 = vsel %vm292, %v555, %v556
    %v564 = vsel %vm292, %v554, %v555
    %v565 = vsel %vm292, %v553, %v554
    %v566 = vsel %vm292, %v552, %v553
    %v567 = vsel %vm292, %v559, %v552
    %v568 = vsel %vm49, %v566, 0.0
    %v569 = vsel %vm50, %v565, 0.0
    %v570 = vsel %vm51, %v564, 0.0
    %v571 = vsel %vm52, %v563, 0.0
    %v572 = vsel %vm53, %v562, 0.0
    %v573 = vsel %vm54, %v561, 0.0
    %v574 = vsel %vm55, %v560, 0.0
    %v575 = vsel %vm56, %v567, 0.0
    %v576 = vadd.f32 %v498, %v568
    %v577 = vadd.f32 %v499, %v569
    %v578 = vadd.f32 %v500, %v570
    %v579 = vadd.f32 %v501, %v571
    %v580 = vadd.f32 %v502, %v572
    %v581 = vadd.f32 %v503, %v573
    %v582 = vadd.f32 %v504, %v574
    %v583 = vadd.f32 %v505, %v575
    %s584 = scalar_lea.vmem [#allocation7], 64
    %585 = vst [vmem:[%s584] sm:$0xff] %v576
    %586 = vst [vmem:[%s584 + $0x8] sm:$0xff] %v577
    %587 = vst [vmem:[%s584 + $0x10] sm:$0xff] %v578
    %588 = vst [vmem:[%s584 + $0x18] sm:$0xff] %v579
    %589 = vst [vmem:[%s584 + $0x20] sm:$0xff] %v580
    %590 = vst [vmem:[%s584 + $0x28] sm:$0xff] %v581
    %591 = vst [vmem:[%s584 + $0x30] sm:$0xff] %v582
    %592 = vst [vmem:[%s584 + $0x38] sm:$0xff] %v583
    // Predicated region
    $region10: #{tpu_custom_call.1} parent=1 // pred_check
      _
    $region11: #{tpu_custom_call.1} parent=1 // pred_check_branch
      %594 = sbr.rel (0) target = $region13
    $region12: #{tpu_custom_call.1} parent=1 // pred_region
      %s596 = ssub.s32 2048, 2048
      %597 = vsyncadd [#allocation6], %s596
      %s598 = sshll.u32 [#allocation7], 4
      %s599 = int_to_ptr.vmem [resolvable:$true] %s598
      %604 = dma.vmem_to_hbm [thread:$0]  %s599, 2048, %s2, [#allocation6], 128, 128, 8
    $region13: #{tpu_custom_call.1} parent=1 // pred_fallthru
      _
    // Predicated region
    $region14: #{tpu_custom_call.1} parent=1 // pred_check
      _
    $region15: #{tpu_custom_call.1} parent=1 // pred_check_branch
      %606 = sbr.rel (0) target = $region17
    $region16: #{tpu_custom_call.1} parent=1 // pred_region
      %607 = dma.done [#allocation6], 2048
    $region17: #{tpu_custom_call.1} parent=1 // pred_fallthru
      _
    %608 = vsyncpa [#allocation5], 1
    %609 = vsyncpa [#allocation6], 1

</llo_original>
